<compile_context>
chip_gen: v6e
topology: v6e:2x2x1
jax: 0.10.0
libtpu: 0.0.40
codegen_flags: <defaults>
</compile_context>

<pallas_src>
import math

import jax
import jax.numpy as jnp
from jax.experimental import pallas as pl
from jax.experimental.pallas import tpu as pltpu


def _round_up(n, m):
    return ((n + m - 1) // m) * m


def make_dense_block_kernel(layers, inp_pad, out_pad):
    """Kernel refs = (x, wT_0, b_0, ..., wT_{L-1}, b_{L-1}, y, feats_scratch)."""

    def kernel(x_ref, *refs):
        y_ref = refs[2 * layers]                  # (tb, total_pad) f32 output tile
        feats = refs[2 * layers + 1]              # (tb, total_pad) compute-dtype scratch

        x = x_ref[...]                            # (tb, inp_pad) f32, lane-dense
        y_ref[:, :inp_pad] = x
        feats[:, :inp_pad] = x.astype(feats.dtype)

        for i in range(layers):
            k = inp_pad + i * out_pad             # 128-aligned prefix width
            wt = refs[2 * i][...]                 # (k, out_pad) pre-transposed + padded
            b = refs[2 * i + 1][...]              # (1, out_pad) f32
            h = jnp.dot(feats[:, :k], wt, preferred_element_type=jnp.float32)
            h = jnp.maximum(h + b, 0.0)           # bias + ReLU in f32
            # TODO(synk): torch.nn.Dropout is the identity in eval/inference mode.
            y_ref[:, k:k + out_pad] = h                      # aligned slice store (f32)
            feats[:, k:k + out_pad] = h.astype(feats.dtype)  # feeds next layer's matmul

    return kernel


def dense_block(x, params, *, batch_tile=512, compute_dtype=jnp.bfloat16):
    """Pallas DenseBlock forward.

    x:      (B, inp) float32
    params: list of (W, b) in PyTorch layout: W is (out, in_i) with in_i = inp + i*out,
            b is (out,).
    returns (B, inp + layers*out) float32
    """
    x = jnp.asarray(x, jnp.float32)
    B, inp = x.shape
    layers = len(params)
    out = params[0][0].shape[0]
    total = inp + layers * out

    inp_pad = _round_up(inp, 128)
    out_pad = _round_up(out, 128)
    total_pad = inp_pad + layers * out_pad

    # --- batch tile: largest multiple-of-8 divisor of B not above batch_tile -----------
    if B <= batch_tile:
        tb = B                                    # tiny batch -> single grid step
    else:
        tb = B
        for cand in range(min(batch_tile, B), 7, -1):
            if B % cand == 0 and cand % 8 == 0:
                tb = cand
                break
    grid = (B // tb,)

    # --- pad x to lane-dense width -------------------------------------------------------
    x_pad = jnp.pad(x, ((0, 0), (0, inp_pad - inp)))

    # --- pre-transpose + zero-pad weights so every matmul operand is 128-aligned ---------
    args = [x_pad]
    in_specs = [pl.BlockSpec((tb, inp_pad), lambda i: (i, 0))]
    weight_bytes = 0
    for li, (w, b) in enumerate(params):
        in_i = inp + li * out
        wt = jnp.asarray(w, jnp.float32).T        # (in_i, out)
        k_pad = inp_pad + li * out_pad
        wt_pad = jnp.zeros((k_pad, out_pad), jnp.float32)
        wt_pad = wt_pad.at[:inp, :out].set(wt[:inp])              # rows for the x block
        for j in range(li):                                       # rows for h_j blocks
            r0 = inp + j * out
            c0 = inp_pad + j * out_pad
            wt_pad = wt_pad.at[c0:c0 + out, :out].set(wt[r0:r0 + out])
        wt_pad = wt_pad.astype(compute_dtype)
        b_pad = jnp.zeros((1, out_pad), jnp.float32).at[0, :out].set(
            jnp.asarray(b, jnp.float32))
        args += [wt_pad, b_pad]
        # whole-array VMEM residents: grid-invariant, no per-step double-buffering
        in_specs += [pl.BlockSpec(memory_space=pltpu.MemorySpace.VMEM),
                     pl.BlockSpec(memory_space=pltpu.MemorySpace.VMEM)]
        weight_bytes += wt_pad.size * wt_pad.dtype.itemsize + b_pad.size * 4

    # --- VMEM budget: 2x (x, y) pipeline buffers + feats scratch + resident weights ------
    est = (2 * tb * inp_pad * 4 + 2 * tb * total_pad * 4
           + tb * total_pad * jnp.dtype(compute_dtype).itemsize + weight_bytes)
    vmem_limit = min(max(int(1.5 * est) + (1 << 20), 32 << 20), 64 << 20)

    y_pad = pl.pallas_call(
        make_dense_block_kernel(layers, inp_pad, out_pad),
        out_shape=jax.ShapeDtypeStruct((B, total_pad), jnp.float32),
        grid=grid,
        in_specs=in_specs,
        out_specs=pl.BlockSpec((tb, total_pad), lambda i: (i, 0)),
        scratch_shapes=[pltpu.VMEM((tb, total_pad), compute_dtype)],
        compiler_params=pltpu.CompilerParams(
            dimension_semantics=("parallel",),    # batch tiles are independent (v7x 2 TCs)
            vmem_limit_bytes=vmem_limit,
        ),
    )(*args)

    # --- drop the alignment padding (pure XLA slicing in the wrapper) --------------------
    if inp_pad == inp and out_pad == out:
        return y_pad                              # already the packed layout
    pieces = [y_pad[:, :inp]]
    for li in range(layers):
        s = inp_pad + li * out_pad
        pieces.append(y_pad[:, s:s + out])
    return jnp.concatenate(pieces, axis=-1)


def reference(x, params):
    """Pure-JAX f32 reference mirroring the PyTorch DenseBlock forward (eval mode)."""
    feats = x
    for (w, b) in params:
        h = jnp.maximum(feats @ w.T + b, 0.0)
        feats = jnp.concatenate([feats, h], axis=-1)
    return feats


def make_params(key, inp, out, layers):
    """PyTorch nn.Linear default init: U(-1/sqrt(fan_in), 1/sqrt(fan_in))."""
    keys = jax.random.split(key, 2 * layers)
    params = []
    for i in range(layers):
        fan_in = inp + i * out
        s = 1.0 / math.sqrt(fan_in)
        w = jax.random.uniform(keys[2 * i], (out, fan_in), jnp.float32, -s, s)
        b = jax.random.uniform(keys[2 * i + 1], (out,), jnp.float32, -s, s)
        params.append((w, b))
    return params


if __name__ == "__main__":
    B, INP, OUT, LAYERS = 16, 16, 32, 2      # batch, inp features, out per layer, layers
    key = jax.random.PRNGKey(0)
    kx, kp = jax.random.split(key)
    x = jax.random.normal(kx, (B, INP), jnp.float32)
    params = make_params(kp, INP, OUT, LAYERS)

    y_ref = jax.block_until_ready(reference(x, params))

    # default path: bf16 weights/LHS, f32 accumulation, single grid step for tiny batch
    y = jax.block_until_ready(dense_block(x, params))
    assert y.shape == (B, INP + LAYERS * OUT), y.shape
    err = float(jnp.max(jnp.abs(y - y_ref)))
    assert err < 2e-2, err                   # bf16 MXU path vs f32 reference

    # f32 path with a 2-step batch grid: exact match, exercises tb < B tiling
    y32 = jax.block_until_ready(
        dense_block(x, params, batch_tile=8, compute_dtype=jnp.float32))
    assert jnp.allclose(y32, y_ref, atol=1e-5, rtol=1e-5), float(
        jnp.max(jnp.abs(y32 - y_ref)))

    print("KERNEL_OK")
</pallas_src>

<mosaic_0001>
module attributes {stable_mosaic.version = 11 : i64} {
  func.func @kernel(%arg0: i32, %arg1: memref<16x128xf32, #tpu.memory_space<vmem>>, %arg2: memref<128x128xbf16, #tpu.memory_space<vmem>>, %arg3: memref<1x128xf32, #tpu.memory_space<vmem>>, %arg4: memref<256x128xbf16, #tpu.memory_space<vmem>>, %arg5: memref<1x128xf32, #tpu.memory_space<vmem>>, %arg6: memref<16x384xf32, #tpu.memory_space<vmem>>, %arg7: memref<16x384xbf16, #tpu.memory_space<vmem>>) attributes {dimension_semantics = [#tpu.dimension_semantics<parallel>], iteration_bounds = array<i64: 1>, scalar_prefetch = 0 : i64, scratch_operands = 1 : i64, tpu.core_type = #tpu.core_type<tc>, window_params = [{transform_indices = @transform_0, window_bounds = array<i64: 16, 128>}, {pipeline_mode = #tpu.pipeline_mode<synchronous>, transform_indices = @transform_1, window_bounds = array<i64: 128, 128>}, {pipeline_mode = #tpu.pipeline_mode<synchronous>, transform_indices = @transform_2, window_bounds = array<i64: 1, 128>}, {pipeline_mode = #tpu.pipeline_mode<synchronous>, transform_indices = @transform_3, window_bounds = array<i64: 256, 128>}, {pipeline_mode = #tpu.pipeline_mode<synchronous>, transform_indices = @transform_4, window_bounds = array<i64: 1, 128>}, {transform_indices = @transform_5, window_bounds = array<i64: 16, 384>}]} {
    %c0 = arith.constant 0 : index
    %c0_0 = arith.constant 0 : index
    %0 = vector.load %arg1[%c0, %c0_0] : memref<16x128xf32, #tpu.memory_space<vmem>>, vector<16x128xf32>
    %c0_1 = arith.constant 0 : index
    %c0_2 = arith.constant 0 : index
    %1 = vector.load %arg6[%c0_1, %c0_2] : memref<16x384xf32, #tpu.memory_space<vmem>>, vector<16x128xf32>
    tpu.vector_store %arg6[%c0_1, %c0_2], %0 {strides = array<i32>} : memref<16x384xf32, #tpu.memory_space<vmem>>, vector<16x128xf32>,
    %2 = arith.truncf %0 : vector<16x128xf32> to vector<16x128xbf16>
    %c0_3 = arith.constant 0 : index
    %c0_4 = arith.constant 0 : index
    %3 = vector.load %arg7[%c0_3, %c0_4] : memref<16x384xbf16, #tpu.memory_space<vmem>>, vector<16x128xbf16>
    tpu.vector_store %arg7[%c0_3, %c0_4], %2 {strides = array<i32>} : memref<16x384xbf16, #tpu.memory_space<vmem>>, vector<16x128xbf16>,
    %c0_5 = arith.constant 0 : index
    %c0_6 = arith.constant 0 : index
    %4 = vector.load %arg2[%c0_5, %c0_6] : memref<128x128xbf16, #tpu.memory_space<vmem>>, vector<128x128xbf16>
    %c0_7 = arith.constant 0 : index
    %c0_8 = arith.constant 0 : index
    %5 = vector.load %arg3[%c0_7, %c0_8] : memref<1x128xf32, #tpu.memory_space<vmem>>, vector<1x128xf32>
    %c0_9 = arith.constant 0 : index
    %c0_10 = arith.constant 0 : index
    %6 = vector.load %arg7[%c0_9, %c0_10] : memref<16x384xbf16, #tpu.memory_space<vmem>>, vector<16x128xbf16>
    %cst = arith.constant dense<0.000000e+00> : vector<16x128xf32>
    %7 = tpu.matmul %6, %4, %cst {dimension_numbers = #tpu.dot_dimension_numbers<[1], [0], [0], [1], [0, 0, 1, 1], [], []>} : vector<16x128xbf16>, vector<128x128xbf16>, vector<16x128xf32> -> vector<16x128xf32>
    %8 = vector.broadcast %5 : vector<1x128xf32> to vector<16x128xf32>
    %9 = arith.addf %7, %8 : vector<16x128xf32>
    %cst_11 = arith.constant 0.000000e+00 : f32
    %10 = vector.broadcast %cst_11 : f32 to vector<16x128xf32>
    %11 = arith.maximumf %9, %10 : vector<16x128xf32>
    %c0_12 = arith.constant 0 : index
    %c128 = arith.constant 128 : index
    %12 = vector.load %arg6[%c0_12, %c128] : memref<16x384xf32, #tpu.memory_space<vmem>>, vector<16x128xf32>
    tpu.vector_store %arg6[%c0_12, %c128], %11 {strides = array<i32>} : memref<16x384xf32, #tpu.memory_space<vmem>>, vector<16x128xf32>,
    %13 = arith.truncf %11 : vector<16x128xf32> to vector<16x128xbf16>
    %c0_13 = arith.constant 0 : index
    %c128_14 = arith.constant 128 : index
    %14 = vector.load %arg7[%c0_13, %c128_14] : memref<16x384xbf16, #tpu.memory_space<vmem>>, vector<16x128xbf16>
    tpu.vector_store %arg7[%c0_13, %c128_14], %13 {strides = array<i32>} : memref<16x384xbf16, #tpu.memory_space<vmem>>, vector<16x128xbf16>,
    %c0_15 = arith.constant 0 : index
    %c0_16 = arith.constant 0 : index
    %15 = vector.load %arg4[%c0_15, %c0_16] : memref<256x128xbf16, #tpu.memory_space<vmem>>, vector<256x128xbf16>
    %c0_17 = arith.constant 0 : index
    %c0_18 = arith.constant 0 : index
    %16 = vector.load %arg5[%c0_17, %c0_18] : memref<1x128xf32, #tpu.memory_space<vmem>>, vector<1x128xf32>
    %c0_19 = arith.constant 0 : index
    %c0_20 = arith.constant 0 : index
    %17 = vector.load %arg7[%c0_19, %c0_20] : memref<16x384xbf16, #tpu.memory_space<vmem>>, vector<16x256xbf16>
    %cst_21 = arith.constant dense<0.000000e+00> : vector<16x128xf32>
    %18 = tpu.matmul %17, %15, %cst_21 {dimension_numbers = #tpu.dot_dimension_numbers<[1], [0], [0], [1], [0, 0, 1, 1], [], []>} : vector<16x256xbf16>, vector<256x128xbf16>, vector<16x128xf32> -> vector<16x128xf32>
    %19 = vector.broadcast %16 : vector<1x128xf32> to vector<16x128xf32>
    %20 = arith.addf %18, %19 : vector<16x128xf32>
    %cst_22 = arith.constant 0.000000e+00 : f32
    %21 = vector.broadcast %cst_22 : f32 to vector<16x128xf32>
    %22 = arith.maximumf %20, %21 : vector<16x128xf32>
    %c0_23 = arith.constant 0 : index
    %c256 = arith.constant 256 : index
    %23 = vector.load %arg6[%c0_23, %c256] : memref<16x384xf32, #tpu.memory_space<vmem>>, vector<16x128xf32>
    tpu.vector_store %arg6[%c0_23, %c256], %22 {strides = array<i32>} : memref<16x384xf32, #tpu.memory_space<vmem>>, vector<16x128xf32>,
    %24 = arith.truncf %22 : vector<16x128xf32> to vector<16x128xbf16>
    %c0_24 = arith.constant 0 : index
    %c256_25 = arith.constant 256 : index
    %25 = vector.load %arg7[%c0_24, %c256_25] : memref<16x384xbf16, #tpu.memory_space<vmem>>, vector<16x128xbf16>
    tpu.vector_store %arg7[%c0_24, %c256_25], %24 {strides = array<i32>} : memref<16x384xbf16, #tpu.memory_space<vmem>>, vector<16x128xbf16>,
    return
  }
  func.func @transform_0(%arg0: i32) -> (i32, i32) {
    %c0_i32 = arith.constant 0 : i32
    %c0_i32_0 = arith.constant 0 : i32
    return %arg0, %c0_i32 : i32, i32
  }
  func.func @transform_1(%arg0: i32) -> (i32, i32) {
    %c0_i32 = arith.constant 0 : i32
    %c0_i32_0 = arith.constant 0 : i32
    %c0_i32_1 = arith.constant 0 : i32
    return %c0_i32, %c0_i32_0 : i32, i32
  }
  func.func @transform_2(%arg0: i32) -> (i32, i32) {
    %c0_i32 = arith.constant 0 : i32
    %c0_i32_0 = arith.constant 0 : i32
    %c0_i32_1 = arith.constant 0 : i32
    return %c0_i32, %c0_i32_0 : i32, i32
  }
  func.func @transform_3(%arg0: i32) -> (i32, i32) {
    %c0_i32 = arith.constant 0 : i32
    %c0_i32_0 = arith.constant 0 : i32
    %c0_i32_1 = arith.constant 0 : i32
    return %c0_i32, %c0_i32_0 : i32, i32
  }
  func.func @transform_4(%arg0: i32) -> (i32, i32) {
    %c0_i32 = arith.constant 0 : i32
    %c0_i32_0 = arith.constant 0 : i32
    %c0_i32_1 = arith.constant 0 : i32
    return %c0_i32, %c0_i32_0 : i32, i32
  }
  func.func @transform_5(%arg0: i32) -> (i32, i32) {
    %c0_i32 = arith.constant 0 : i32
    %c0_i32_0 = arith.constant 0 : i32
    return %arg0, %c0_i32 : i32, i32
  }
}

</mosaic_0001>

<llo_original>
// kernel: tpu_custom_call.1
$region0: #{tpu_custom_call.1}
  #allocation0 [shape = 'u32[]', space=smem, size = 0x4, offset = 0x4, fixed_abs, tag = 'smem constant byte address 0x4 - core index']
  #allocation1 [shape = 'u32[144,128]{1,0:T(1,128)}', space=vmem, size = 0x12000, scoped, tag = 'internal scratch']
  #allocation2 [shape = 'bf16[16,384]{1,0:T(8,128)(2,1)}', space=vmem, size = 0x3000, scoped, tag = 'scratch operand']
  %s0 = inlined_call_operand.hbm [shape: f32[16,128], index: 0, kind: input, shape index: {}]
  %s1 = inlined_call_operand.hbm [shape: bf16[128,128], index: 1, kind: input, shape index: {}]
  %s2 = inlined_call_operand.vmem [shape: f32[1,128], index: 2, kind: input, shape index: {}]
  %s3 = inlined_call_operand.hbm [shape: bf16[256,128], index: 3, kind: input, shape index: {}]
  %s4 = inlined_call_operand.vmem [shape: f32[1,128], index: 4, kind: input, shape index: {}]
  %s5 = inlined_call_operand.hbm [shape: f32[16,384], index: 5, kind: output, shape index: {}]
  %s6 = sld [smem:[#allocation0]]
  $region42: #{tpu_custom_call.1} parent=0
    _
  %s8 = ssub.s32 1, %s6
  %s9 = scalar_select 0, %s8, %s6
  $region1: #{tpu_custom_call.1} parent=0
    #allocation3 [shape = 'u8[8192]{0}', space=vmem, size = 0x2000, scoped, tag = 'input window, operand 0, single buffered']
    #allocation4 [shape = 's32[1]{0}', space=sflag, size = 0x4, scoped, tag = 'scoped memory for tpu_custom_call.1']
    #allocation5 [shape = 's32[1]{0}', space=sflag, size = 0x4, scoped, tag = 'scoped memory for tpu_custom_call.1']
    #allocation6 [shape = 'u8[32768]{0}', space=vmem, size = 0x8000, scoped, tag = 'input window, operand 1, single buffered']
    #allocation7 [shape = 's32[1]{0}', space=sflag, size = 0x4, scoped, tag = 'scoped memory for tpu_custom_call.1']
    #allocation8 [shape = 'u8[65536]{0}', space=vmem, size = 0x10000, scoped, tag = 'input window, operand 3, single buffered']
    #allocation9 [shape = 'u8[24576]{0}', space=vmem, size = 0x6000, scoped, tag = 'output window, operand 0, single buffered']
    %10 = vsyncpa [#allocation4], 0
    %11 = vsyncpa [#allocation7], 0
    %12 = vsyncpa [#allocation5], 0
    // Predicated region
    $region2: #{tpu_custom_call.1} parent=1 // pred_check
      _
    $region3: #{tpu_custom_call.1} parent=1 // pred_check_branch
      %14 = sbr.rel (0) target = $region5
    $region4: #{tpu_custom_call.1} parent=1 // pred_region
      %s16 = ssub.s32 256, 256
      %17 = vsyncadd [#allocation4], %s16
      %s18 = sshll.u32 [#allocation3], 4
      %s19 = int_to_ptr.vmem [resolvable:$true] %s18
      %24 = dma.hbm_to_vmem [thread:$0]  %s0, 256, %s19, [#allocation4], 128, 128, 8
    $region5: #{tpu_custom_call.1} parent=1 // pred_fallthru
      _
    // Predicated region
    $region6: #{tpu_custom_call.1} parent=1 // pred_check
      _
    $region7: #{tpu_custom_call.1} parent=1 // pred_check_branch
      %26 = sbr.rel (0) target = $region9
    $region8: #{tpu_custom_call.1} parent=1 // pred_region
      %s28 = ssub.s32 1024, 1024
      %29 = vsyncadd [#allocation7], %s28
      %s30 = sshll.u32 [#allocation6], 4
      %s31 = int_to_ptr.vmem [resolvable:$true] %s30
      %36 = dma.hbm_to_vmem [thread:$0]  %s1, 1024, %s31, [#allocation7], 64, 64, 4
    $region9: #{tpu_custom_call.1} parent=1 // pred_fallthru
      _
    // Predicated region
    $region10: #{tpu_custom_call.1} parent=1 // pred_check
      _
    $region11: #{tpu_custom_call.1} parent=1 // pred_check_branch
      %38 = sbr.rel (0) target = $region13
    $region12: #{tpu_custom_call.1} parent=1 // pred_region
      _
    $region13: #{tpu_custom_call.1} parent=1 // pred_fallthru
      _
    // Predicated region
    $region14: #{tpu_custom_call.1} parent=1 // pred_check
      _
    $region15: #{tpu_custom_call.1} parent=1 // pred_check_branch
      %40 = sbr.rel (0) target = $region17
    $region16: #{tpu_custom_call.1} parent=1 // pred_region
      %s42 = ssub.s32 2048, 2048
      %43 = vsyncadd [#allocation7], %s42
      %s44 = sshll.u32 [#allocation8], 4
      %s45 = int_to_ptr.vmem [resolvable:$true] %s44
      %50 = dma.hbm_to_vmem [thread:$0]  %s3, 2048, %s45, [#allocation7], 64, 64, 4
    $region17: #{tpu_custom_call.1} parent=1 // pred_fallthru
      _
    // Predicated region
    $region18: #{tpu_custom_call.1} parent=1 // pred_check
      _
    $region19: #{tpu_custom_call.1} parent=1 // pred_check_branch
      %52 = sbr.rel (0) target = $region21
    $region20: #{tpu_custom_call.1} parent=1 // pred_region
      _
    $region21: #{tpu_custom_call.1} parent=1 // pred_fallthru
      _
    // Predicated region
    $region22: #{tpu_custom_call.1} parent=1 // pred_check
      _
    $region23: #{tpu_custom_call.1} parent=1 // pred_check_branch
      %54 = sbr.rel (0) target = $region25
    $region24: #{tpu_custom_call.1} parent=1 // pred_region
      %55 = dma.done [#allocation4], 256
    $region25: #{tpu_custom_call.1} parent=1 // pred_fallthru
      _
    // Predicated region
    $region26: #{tpu_custom_call.1} parent=1 // pred_check
      _
    $region27: #{tpu_custom_call.1} parent=1 // pred_check_branch
      %57 = sbr.rel (0) target = $region29
    $region28: #{tpu_custom_call.1} parent=1 // pred_region
      %58 = dma.done [#allocation7], 1024
    $region29: #{tpu_custom_call.1} parent=1 // pred_fallthru
      _
    // Predicated region
    $region30: #{tpu_custom_call.1} parent=1 // pred_check
      _
    $region31: #{tpu_custom_call.1} parent=1 // pred_check_branch
      %60 = sbr.rel (0) target = $region33
    $region32: #{tpu_custom_call.1} parent=1 // pred_region
      %61 = dma.done [#allocation7], 2048
    $region33: #{tpu_custom_call.1} parent=1 // pred_fallthru
      _
    %v63 = vld [vmem:[#allocation3] sm:$0xff]
    %v64 = vld [vmem:[#allocation3 + $0x8] sm:$0xff]
    %65 = vst [vmem:[#allocation9] sm:$0xff] %v63
    %66 = vst [vmem:[#allocation9 + $0x18] sm:$0xff] %v64
    %v67 = vpack.c.bf16 %v64, %v63
    %v69 = vunpack.c.l.b16 %v67
    %v70 = vunpack.c.h.b16 %v67
    %v71 = vpack.c.b16 %v69, %v69
    %v72 = vpack.c.b16 %v70, %v70
    %75 = vst [vmem:[#allocation2] sm:$0xf] %v71
    %76 = vst [vmem:[#allocation2 + $0xc] sm:$0xf] %v72
    %v77 = vld [vmem:[#allocation6] sm:$0xf]
    %v78 = vld [vmem:[#allocation6 + $0x4] sm:$0xf]
    %v79 = vld [vmem:[#allocation6 + $0x8] sm:$0xf]
    %v80 = vld [vmem:[#allocation6 + $0xc] sm:$0xf]
    %v81 = vld [vmem:[#allocation6 + $0x10] sm:$0xf]
    %v82 = vld [vmem:[#allocation6 + $0x14] sm:$0xf]
    %v83 = vld [vmem:[#allocation6 + $0x18] sm:$0xf]
    %v84 = vld [vmem:[#allocation6 + $0x1c] sm:$0xf]
    %v85 = vld [vmem:[#allocation6 + $0x20] sm:$0xf]
    %v86 = vld [vmem:[#allocation6 + $0x24] sm:$0xf]
    %v87 = vld [vmem:[#allocation6 + $0x28] sm:$0xf]
    %v88 = vld [vmem:[#allocation6 + $0x2c] sm:$0xf]
    %v89 = vld [vmem:[#allocation6 + $0x30] sm:$0xf]
    %v90 = vld [vmem:[#allocation6 + $0x34] sm:$0xf]
    %v91 = vld [vmem:[#allocation6 + $0x38] sm:$0xf]
    %v92 = vld [vmem:[#allocation6 + $0x3c] sm:$0xf]
    %v93 = vld [vmem:[%s2] sm:$0x1]
    %v94 = vld [vmem:[#allocation2] sm:$0xf]
    %v95 = vld [vmem:[#allocation2 + $0xc] sm:$0xf]
    %v97 = vlaneseq
    %v98 = vshrl.u32 %v97, 7
    %v99 = vsub.s32 0, %v98
    %v100 = vrot.slane %v93, %v99
    %v104 = vunpack.c.l.b16 %v94
    %v105 = vunpack.c.l.b16 %v95
    %v106 = vpack.c.b16 %v105, %v104
    %v124 = vunpack.c.l.b16 %v77
    %v125 = vunpack.c.l.b16 %v78
    %v126 = vunpack.c.l.b16 %v79
    %v127 = vunpack.c.l.b16 %v80
    %v128 = vunpack.c.l.b16 %v81
    %v129 = vunpack.c.l.b16 %v82
    %v130 = vunpack.c.l.b16 %v83
    %v131 = vunpack.c.l.b16 %v84
    %v132 = vunpack.c.l.b16 %v85
    %v133 = vunpack.c.l.b16 %v86
    %v134 = vunpack.c.l.b16 %v87
    %v135 = vunpack.c.l.b16 %v88
    %v136 = vunpack.c.l.b16 %v89
    %v137 = vunpack.c.l.b16 %v90
    %v138 = vunpack.c.l.b16 %v91
    %v139 = vunpack.c.l.b16 %v92
    %v140 = vpack.c.b16 %v125, %v124
    %v141 = vpack.c.b16 %v127, %v126
    %v142 = vpack.c.b16 %v129, %v128
    %v143 = vpack.c.b16 %v131, %v130
    %v144 = vpack.c.b16 %v133, %v132
    %v145 = vpack.c.b16 %v135, %v134
    %v146 = vpack.c.b16 %v137, %v136
    %v147 = vpack.c.b16 %v139, %v138
    %156 = vmatprep.subr.bf16.mxu0 0
    %157 = vmatpush1.bf16.msra.mxu0 %v147
    %158 = vmatprep.subr.bf16.mxu0 0
    %159 = vmatpush1.bf16.msra.mxu0 %v146
    %160 = vmatprep.subr.bf16.mxu0 0
    %161 = vmatpush1.bf16.msra.mxu0 %v145
    %162 = vmatprep.subr.bf16.mxu0 0
    %163 = vmatpush1.bf16.msra.mxu0 %v144
    %164 = vmatprep.subr.bf16.mxu0 0
    %165 = vmatpush1.bf16.msra.mxu0 %v143
    %166 = vmatprep.subr.bf16.mxu0 0
    %167 = vmatpush1.bf16.msra.mxu0 %v142
    %168 = vmatprep.subr.bf16.mxu0 0
    %169 = vmatpush1.bf16.msra.mxu0 %v141
    %170 = vmatprep.subr.bf16.mxu0 0
    %171 = vmatpush1.bf16.msra.mxu0 %v140
    %172 = vmatprep.subr.bf16.mxu0 0
    %173 = vmatpush2.bf16.msra.mxu0 0
    %174 = vmatprep.subr.bf16.mxu0 0
    %175 = vmatpush2.bf16.msra.mxu0 0
    %176 = vmatprep.subr.bf16.mxu0 0
    %177 = vmatpush2.bf16.msra.mxu0 0
    %178 = vmatprep.subr.bf16.mxu0 0
    %179 = vmatpush2.bf16.msra.mxu0 0
    %180 = vmatprep.subr.bf16.mxu0 0
    %181 = vmatpush2.bf16.msra.mxu0 0
    %182 = vmatprep.subr.bf16.mxu0 0
    %183 = vmatpush2.bf16.msra.mxu0 0
    %184 = vmatprep.subr.bf16.mxu0 0
    %185 = vmatpush2.bf16.msra.mxu0 0
    %186 = vmatprep.subr.bf16.mxu0 0
    %187 = vmatpush2.bf16.msra.mxu0 0
    %188 = vmatprep.mubr.bf16.mxu0 0
    %189 = vmatmul.mubr.bf16.gmra.mxu0 %v106
    %v190 = vpop.f32.mrf.mxu0
    %v191 = vadd.f32 %v100, %v190
    %v192 = vpop.f32.mrf.mxu0
    %v193 = vpop.f32.mrf.mxu0
    %v194 = vadd.f32 %v100, %v193
    %v195 = vpop.f32.mrf.mxu0
    %196 = vdwg.mxu0
    %v197 = vmax.f32 %v191, 0.0
    %v198 = vmax.f32 %v194, 0.0
    %199 = vst [vmem:[#allocation9 + $0x8] sm:$0xff] %v197
    %200 = vst [vmem:[#allocation9 + $0x20] sm:$0xff] %v198
    %v201 = vpack.c.bf16 %v198, %v197
    %v203 = vunpack.c.l.b16 %v201
    %v204 = vunpack.c.h.b16 %v201
    %v205 = vpack.c.b16 %v203, %v203
    %v206 = vpack.c.b16 %v204, %v204
    %209 = vst [vmem:[#allocation2 + $0x4] sm:$0xf] %v205
    %210 = vst [vmem:[#allocation2 + $0x10] sm:$0xf] %v206
    %v211 = vld [vmem:[#allocation8] sm:$0xf]
    %v212 = vld [vmem:[#allocation8 + $0x4] sm:$0xf]
    %v213 = vld [vmem:[#allocation8 + $0x8] sm:$0xf]
    %v214 = vld [vmem:[#allocation8 + $0xc] sm:$0xf]
    %v215 = vld [vmem:[#allocation8 + $0x10] sm:$0xf]
    %v216 = vld [vmem:[#allocation8 + $0x14] sm:$0xf]
    %v217 = vld [vmem:[#allocation8 + $0x18] sm:$0xf]
    %v218 = vld [vmem:[#allocation8 + $0x1c] sm:$0xf]
    %v219 = vld [vmem:[#allocation8 + $0x20] sm:$0xf]
    %v220 = vld [vmem:[#allocation8 + $0x24] sm:$0xf]
    %v221 = vld [vmem:[#allocation8 + $0x28] sm:$0xf]
    %v222 = vld [vmem:[#allocation8 + $0x2c] sm:$0xf]
    %v223 = vld [vmem:[#allocation8 + $0x30] sm:$0xf]
    %v224 = vld [vmem:[#allocation8 + $0x34] sm:$0xf]
    %v225 = vld [vmem:[#allocation8 + $0x38] sm:$0xf]
    %v226 = vld [vmem:[#allocation8 + $0x3c] sm:$0xf]
    %v227 = vld [vmem:[#allocation8 + $0x40] sm:$0xf]
    %v228 = vld [vmem:[#allocation8 + $0x44] sm:$0xf]
    %v229 = vld [vmem:[#allocation8 + $0x48] sm:$0xf]
    %v230 = vld [vmem:[#allocation8 + $0x4c] sm:$0xf]
    %v231 = vld [vmem:[#allocation8 + $0x50] sm:$0xf]
    %v232 = vld [vmem:[#allocation8 + $0x54] sm:$0xf]
    %v233 = vld [vmem:[#allocation8 + $0x58] sm:$0xf]
    %v234 = vld [vmem:[#allocation8 + $0x5c] sm:$0xf]
    %v235 = vld [vmem:[#allocation8 + $0x60] sm:$0xf]
    %v236 = vld [vmem:[#allocation8 + $0x64] sm:$0xf]
    %v237 = vld [vmem:[#allocation8 + $0x68] sm:$0xf]
    %v238 = vld [vmem:[#allocation8 + $0x6c] sm:$0xf]
    %v239 = vld [vmem:[#allocation8 + $0x70] sm:$0xf]
    %v240 = vld [vmem:[#allocation8 + $0x74] sm:$0xf]
    %v241 = vld [vmem:[#allocation8 + $0x78] sm:$0xf]
    %v242 = vld [vmem:[#allocation8 + $0x7c] sm:$0xf]
    %v243 = vld [vmem:[%s4] sm:$0x1]
    %v244 = vld [vmem:[#allocation2] sm:$0xff]
    %v245 = vld [vmem:[#allocation2 + $0xc] sm:$0xff]
    %v247 = vlaneseq
    %v248 = vshrl.u32 %v247, 7
    %v249 = vsub.s32 0, %v248
    %v250 = vrot.slane %v243, %v249
    %v254 = vunpack.c.l.b16 %v244
    %v255 = vunpack.c.h.b16 %v244
    %v256 = vunpack.c.l.b16 %v245
    %v257 = vunpack.c.h.b16 %v245
    %v258 = vpack.c.b16 %v256, %v254
    %v259 = vpack.c.b16 %v257, %v255
    %v294 = vunpack.c.l.b16 %v211
    %v295 = vunpack.c.l.b16 %v212
    %v296 = vunpack.c.l.b16 %v213
    %v297 = vunpack.c.l.b16 %v214
    %v298 = vunpack.c.l.b16 %v215
    %v299 = vunpack.c.l.b16 %v216
    %v300 = vunpack.c.l.b16 %v217
    %v301 = vunpack.c.l.b16 %v218
    %v302 = vunpack.c.l.b16 %v219
    %v303 = vunpack.c.l.b16 %v220
    %v304 = vunpack.c.l.b16 %v221
    %v305 = vunpack.c.l.b16 %v222
    %v306 = vunpack.c.l.b16 %v223
    %v307 = vunpack.c.l.b16 %v224
    %v308 = vunpack.c.l.b16 %v225
    %v309 = vunpack.c.l.b16 %v226
    %v310 = vunpack.c.l.b16 %v227
    %v311 = vunpack.c.l.b16 %v228
    %v312 = vunpack.c.l.b16 %v229
    %v313 = vunpack.c.l.b16 %v230
    %v314 = vunpack.c.l.b16 %v231
    %v315 = vunpack.c.l.b16 %v232
    %v316 = vunpack.c.l.b16 %v233
    %v317 = vunpack.c.l.b16 %v234
    %v318 = vunpack.c.l.b16 %v235
    %v319 = vunpack.c.l.b16 %v236
    %v320 = vunpack.c.l.b16 %v237
    %v321 = vunpack.c.l.b16 %v238
    %v322 = vunpack.c.l.b16 %v239
    %v323 = vunpack.c.l.b16 %v240
    %v324 = vunpack.c.l.b16 %v241
    %v325 = vunpack.c.l.b16 %v242
    %v326 = vpack.c.b16 %v295, %v294
    %v327 = vpack.c.b16 %v297, %v296
    %v328 = vpack.c.b16 %v299, %v298
    %v329 = vpack.c.b16 %v301, %v300
    %v330 = vpack.c.b16 %v303, %v302
    %v331 = vpack.c.b16 %v305, %v304
    %v332 = vpack.c.b16 %v307, %v306
    %v333 = vpack.c.b16 %v309, %v308
    %v334 = vpack.c.b16 %v311, %v310
    %v335 = vpack.c.b16 %v313, %v312
    %v336 = vpack.c.b16 %v315, %v314
    %v337 = vpack.c.b16 %v317, %v316
    %v338 = vpack.c.b16 %v319, %v318
    %v339 = vpack.c.b16 %v321, %v320
    %v340 = vpack.c.b16 %v323, %v322
    %v341 = vpack.c.b16 %v325, %v324
    %358 = vmatprep.subr.bf16.mxu0 0
    %359 = vmatpush1.bf16.msra.mxu0 %v333
    %360 = vmatprep.subr.bf16.mxu0 0
    %361 = vmatpush1.bf16.msra.mxu0 %v332
    %362 = vmatprep.subr.bf16.mxu0 0
    %363 = vmatpush1.bf16.msra.mxu0 %v331
    %364 = vmatprep.subr.bf16.mxu0 0
    %365 = vmatpush1.bf16.msra.mxu0 %v330
    %366 = vmatprep.subr.bf16.mxu0 0
    %367 = vmatpush1.bf16.msra.mxu0 %v329
    %368 = vmatprep.subr.bf16.mxu0 0
    %369 = vmatpush1.bf16.msra.mxu0 %v328
    %370 = vmatprep.subr.bf16.mxu0 0
    %371 = vmatpush1.bf16.msra.mxu0 %v327
    %372 = vmatprep.subr.bf16.mxu0 0
    %373 = vmatpush1.bf16.msra.mxu0 %v326
    %374 = vmatprep.subr.bf16.mxu0 0
    %375 = vmatpush2.bf16.msra.mxu0 %v341
    %376 = vmatprep.subr.bf16.mxu0 0
    %377 = vmatpush2.bf16.msra.mxu0 %v340
    %378 = vmatprep.subr.bf16.mxu0 0
    %379 = vmatpush2.bf16.msra.mxu0 %v339
    %380 = vmatprep.subr.bf16.mxu0 0
    %381 = vmatpush2.bf16.msra.mxu0 %v338
    %382 = vmatprep.subr.bf16.mxu0 0
    %383 = vmatpush2.bf16.msra.mxu0 %v337
    %384 = vmatprep.subr.bf16.mxu0 0
    %385 = vmatpush2.bf16.msra.mxu0 %v336
    %386 = vmatprep.subr.bf16.mxu0 0
    %387 = vmatpush2.bf16.msra.mxu0 %v335
    %388 = vmatprep.subr.bf16.mxu0 0
    %389 = vmatpush2.bf16.msra.mxu0 %v334
    %390 = vmatprep.mubr.bf16.mxu0 %v259
    %391 = vmatmul.mubr.bf16.gmra.mxu0 %v258
    %v392 = vpop.f32.mrf.mxu0
    %v393 = vadd.f32 %v250, %v392
    %v394 = vpop.f32.mrf.mxu0
    %v395 = vpop.f32.mrf.mxu0
    %v396 = vadd.f32 %v250, %v395
    %v397 = vpop.f32.mrf.mxu0
    %398 = vdwg.mxu0
    %v399 = vmax.f32 %v393, 0.0
    %v400 = vmax.f32 %v396, 0.0
    %401 = vst [vmem:[#allocation9 + $0x10] sm:$0xff] %v399
    %402 = vst [vmem:[#allocation9 + $0x28] sm:$0xff] %v400
    %v403 = vpack.c.bf16 %v400, %v399
    %v405 = vunpack.c.l.b16 %v403
    %v406 = vunpack.c.h.b16 %v403
    %v407 = vpack.c.b16 %v405, %v405
    %v408 = vpack.c.b16 %v406, %v406
    %411 = vst [vmem:[#allocation2 + $0x8] sm:$0xf] %v407
    %412 = vst [vmem:[#allocation2 + $0x14] sm:$0xf] %v408
    // Predicated region
    $region34: #{tpu_custom_call.1} parent=1 // pred_check
      _
    $region35: #{tpu_custom_call.1} parent=1 // pred_check_branch
      %414 = sbr.rel (0) target = $region37
    $region36: #{tpu_custom_call.1} parent=1 // pred_region
      %s416 = ssub.s32 768, 768
      %417 = vsyncadd [#allocation5], %s416
      %s418 = sshll.u32 [#allocation9], 4
      %s419 = int_to_ptr.vmem [resolvable:$true] %s418
      %424 = dma.vmem_to_hbm [thread:$0]  %s419, 768, %s5, [#allocation5], 384, 384, 24
    $region37: #{tpu_custom_call.1} parent=1 // pred_fallthru
      _
    // Predicated region
    $region38: #{tpu_custom_call.1} parent=1 // pred_check
      _
    $region39: #{tpu_custom_call.1} parent=1 // pred_check_branch
      %426 = sbr.rel (0) target = $region41
    $region40: #{tpu_custom_call.1} parent=1 // pred_region
      %427 = dma.done [#allocation5], 768
    $region41: #{tpu_custom_call.1} parent=1 // pred_fallthru
      _
    %428 = vsyncpa [#allocation4], 1
    %429 = vsyncpa [#allocation7], 1
    %430 = vsyncpa [#allocation5], 1

</llo_original>
